<compile_context>
chip_gen: v7x
topology: tpu7x:2x2x1
jax: 0.10.0
libtpu: 0.0.40
codegen_flags: <defaults>
</compile_context>

<pallas_src>
import jax
import jax.numpy as jnp
from jax import lax
from jax.experimental import pallas as pl
from jax.experimental.pallas import tpu as pltpu  # noqa: F401  (TPU backend)


# ----------------------------- fused Pallas kernel -----------------------------

def make_fused_moe_kernel(expert_num, num_classes):
    E = expert_num
    L = num_classes

    def kernel(patsum_ref, xflat_ref, wr_ref, brP_ref, wall_ref, ball_ref,
               sel_mat_ref, sum_mat_ref,
               out_ref, sel0_ref, loss_ref, maskcnt_ref):
        # ---------------- Router ----------------
        # conv2d(C->E, k=4, s=4) + sum over the two spatial dims
        #   == (sum over patches of the patch) @ W^T + P * bias   (bias pre-scaled)
        s = jnp.dot(patsum_ref[...], wr_ref[...],
                    preferred_element_type=jnp.float32) + brP_ref[...]      # (B, E)

        # F.softmax(select, dim=1): exp on EUP, recip on EUP, rest on VPU, f32.
        m = jnp.max(s, axis=1, keepdims=True)
        ex = jnp.exp(s - m)
        denom = jnp.sum(ex, axis=1, keepdims=True)
        sm = ex * pl.reciprocal(denom, approx=True)                         # (B, E)

        # ------------- routing (torch.no_grad block) -------------
        # TODO(synk): OT-style balanced assignment (get_gamma/postprocess_gamma) is
        # an external dependency; fall back to argmax over the softmaxed logits.
        B = sm.shape[0]
        lane = lax.broadcasted_iota(jnp.int32, (B, E), 1)
        mx = jnp.max(sm, axis=1, keepdims=True)
        idx = jnp.min(jnp.where(sm == mx, lane, E), axis=1, keepdims=True)  # first argmax
        mask = (lane == idx).astype(jnp.float32)                            # one_hot(index, E)

        gate = jnp.sum(sm * mask, axis=1, keepdims=True)                    # (B, 1)
        comb = gate * mask                                                  # combine_tensor (B, E)
        sel0_ref[...] = (comb != 0.0).astype(jnp.float32)                   # dispatch mask

        density = jnp.mean(mask, axis=0, keepdims=True)                     # (1, E)
        density_proxy = jnp.mean(sm, axis=0, keepdims=True)                 # (1, E)
        # (density_proxy * density).mean() * E**2 == sum(...) * E
        loss_ref[...] = jnp.sum(density_proxy * density, axis=1,
                                keepdims=True) * jnp.float32(E)
        maskcnt_ref[...] = jnp.sum(mask, axis=0, keepdims=True)             # (1, E)

        # ------------- experts + combine -------------
        # TODO(synk): ResNet18 experts replaced by linear heads; all E heads stacked
        # into one lane-dense (D, E*L) matmul.  Input masking dropped (see header).
        y = jnp.dot(xflat_ref[...], wall_ref[...],
                    preferred_element_type=jnp.float32) + ball_ref[...]     # (B, E*L)
        # comb_tiled[b, e*L + l] = comb[b, e]   (constant expand matrix on the MXU)
        comb_tiled = jnp.dot(comb, sel_mat_ref[...],
                             preferred_element_type=jnp.float32)            # (B, E*L)
        # out[b, l] = sum_e comb[b, e] * y[b, e*L + l]  (constant fold matrix)
        out_ref[...] = jnp.dot(y * comb_tiled, sum_mat_ref[...],
                               preferred_element_type=jnp.float32)          # (B, L)

    return kernel


def fused_moe_forward(patsum, x_flat, w_r, b_r_scaled, w_all, b_all,
                      sel_mat, sum_mat):
    B = x_flat.shape[0]
    E = w_r.shape[1]
    L = sum_mat.shape[1]
    # Gridless pallas_call: every operand (<1 MiB total at these shapes) lives in
    # VMEM as a single full-array block; one launch, no per-grid-step overhead,
    # no HBM round-trips between the router / routing / expert stages.
    return pl.pallas_call(
        make_fused_moe_kernel(E, L),
        out_shape=(jax.ShapeDtypeStruct((B, L), jnp.float32),   # output
                   jax.ShapeDtypeStruct((B, E), jnp.float32),   # select0 (dispatch)
                   jax.ShapeDtypeStruct((1, 1), jnp.float32),   # loss
                   jax.ShapeDtypeStruct((1, E), jnp.float32)),  # mask_count
    )(patsum, x_flat, w_r, b_r_scaled, w_all, b_all, sel_mat, sum_mat)


# ------------------------------ wrapper -----------------------------------

def nonlinear_mixture_res_forward(params, x):
    B, C, H, W = x.shape
    patch = 4
    E = params["router_w"].shape[0]
    L = params["expert_b"].shape[1]
    ph, pw = H // patch, W // patch
    P = ph * pw
    D = C * H * W

    # The router only ever consumes the spatial sum of the stride==kernel conv, so
    # ship only the (B, C*4*4) patch-sum (no im2col materialization in HBM).
    patsum = x.reshape(B, C, ph, patch, pw, patch).sum(axis=(2, 4)).reshape(
        B, C * patch * patch)
    x_flat = x.reshape(B, D)

    w_r = params["router_w"].reshape(E, -1).T                 # (C*4*4, E)
    b_r_scaled = jnp.float32(P) * params["router_b"].reshape(1, E)   # P*bias folded
    # Stack all expert heads lane-dense: (E, D, L) -> (D, E*L)
    w_all = jnp.transpose(params["expert_w"], (1, 0, 2)).reshape(D, E * L)
    b_all = params["expert_b"].reshape(1, E * L)

    # Constant expand/fold matrices for the gate-weighted combine (folded by XLA).
    cols = jnp.arange(E * L)
    sel_mat = (cols[None, :] // L == jnp.arange(E)[:, None]).astype(jnp.float32)  # (E, E*L)
    sum_mat = (cols[:, None] % L == jnp.arange(L)[None, :]).astype(jnp.float32)   # (E*L, L)

    output, select0, loss, mask_count = fused_moe_forward(
        patsum, x_flat, w_r, b_r_scaled, w_all, b_all, sel_mat, sum_mat)
    embed = None
    return output, select0, loss[0, 0], embed, mask_count


def init_params(key, expert_num, C=3, H=16, W=16, patch=4, num_classes=10):
    D = C * H * W
    k1, k2, k3, k4 = jax.random.split(key, 4)
    # NOTE: Router.reset_parameters() zeroes the conv weight/bias in the original
    # module; small random values are used here so routing is exercised
    # non-degenerately (all-zero logits would route every sample to expert 0).
    router_w = 0.1 * jax.random.normal(k1, (expert_num, C, patch, patch), jnp.float32)
    router_b = 0.1 * jax.random.normal(k2, (expert_num,), jnp.float32)
    expert_w = jax.random.normal(k3, (expert_num, D, num_classes), jnp.float32) / jnp.sqrt(D)
    expert_b = 0.01 * jax.random.normal(k4, (expert_num, num_classes), jnp.float32)
    return dict(router_w=router_w, router_b=router_b,
                expert_w=expert_w, expert_b=expert_b)


if __name__ == "__main__":
    key = jax.random.PRNGKey(0)
    kx, kp = jax.random.split(key)

    B, C, H, W = 8, 3, 16, 16          # router conv expects 3 input channels
    EXPERT_NUM = 4
    NUM_CLASSES = 10

    x = jax.random.normal(kx, (B, C, H, W), dtype=jnp.float32)
    params = init_params(kp, EXPERT_NUM, C, H, W, num_classes=NUM_CLASSES)

    fwd = jax.jit(nonlinear_mixture_res_forward)
    output, select0, loss, embed, mask_count = fwd(params, x)
    jax.block_until_ready((output, select0, loss, mask_count))

    assert output.shape == (B, NUM_CLASSES)
    assert select0.shape == (B, EXPERT_NUM)
    assert mask_count.shape == (1, EXPERT_NUM)
    assert loss.shape == ()
    assert embed is None
    # Each sample dispatched to exactly one expert.
    assert bool(jnp.all(jnp.sum(select0, axis=1) == 1.0))
    assert bool(jnp.isclose(jnp.sum(mask_count), B))
    print("KERNEL_OK")
</pallas_src>

<mosaic_0001>
module attributes {stable_mosaic.version = 11 : i64} {
  func.func @kernel(%arg0: memref<8x48xf32, #tpu.memory_space<vmem>>, %arg1: memref<8x768xf32, #tpu.memory_space<vmem>>, %arg2: memref<48x4xf32, #tpu.memory_space<vmem>>, %arg3: memref<1x4xf32, #tpu.memory_space<vmem>>, %arg4: memref<768x40xf32, #tpu.memory_space<vmem>>, %arg5: memref<1x40xf32, #tpu.memory_space<vmem>>, %arg6: memref<4x40xf32, #tpu.memory_space<vmem>>, %arg7: memref<40x10xf32, #tpu.memory_space<vmem>>, %arg8: memref<8x10xf32, #tpu.memory_space<vmem>>, %arg9: memref<8x4xf32, #tpu.memory_space<vmem>>, %arg10: memref<1x1xf32, #tpu.memory_space<vmem>>, %arg11: memref<1x4xf32, #tpu.memory_space<vmem>>) attributes {dimension_semantics = [], scalar_prefetch = 0 : i64, scratch_operands = 0 : i64, tpu.core_type = #tpu.core_type<tc>} {
    %c0 = arith.constant 0 : index
    %c0_0 = arith.constant 0 : index
    %0 = vector.load %arg0[%c0, %c0_0] : memref<8x48xf32, #tpu.memory_space<vmem>>, vector<8x48xf32>
    %c0_1 = arith.constant 0 : index
    %c0_2 = arith.constant 0 : index
    %1 = vector.load %arg2[%c0_1, %c0_2] : memref<48x4xf32, #tpu.memory_space<vmem>>, vector<48x4xf32>
    %cst = arith.constant dense<0.000000e+00> : vector<8x4xf32>
    %2 = tpu.matmul %0, %1, %cst {dimension_numbers = #tpu.dot_dimension_numbers<[1], [0], [0], [1], [0, 0, 1, 1], [], []>} : vector<8x48xf32>, vector<48x4xf32>, vector<8x4xf32> -> vector<8x4xf32>
    %c0_3 = arith.constant 0 : index
    %c0_4 = arith.constant 0 : index
    %3 = vector.load %arg3[%c0_3, %c0_4] : memref<1x4xf32, #tpu.memory_space<vmem>>, vector<1x4xf32>
    %4 = vector.broadcast %3 : vector<1x4xf32> to vector<8x4xf32>
    %5 = arith.addf %2, %4 : vector<8x4xf32>
    %cst_5 = arith.constant dense<0xFF800000> : vector<8xf32>
    %6 = vector.multi_reduction <maximumf>, %5, %cst_5 [1] : vector<8x4xf32> to vector<8xf32>
    %7 = vector.shape_cast %6 : vector<8xf32> to vector<8x1xf32>
    %8 = vector.broadcast %7 : vector<8x1xf32> to vector<8x4xf32>
    %9 = arith.subf %5, %8 : vector<8x4xf32>
    %10 = math.exp %9 : vector<8x4xf32>
    %cst_6 = arith.constant dense<0.000000e+00> : vector<8xf32>
    %11 = vector.multi_reduction <add>, %10, %cst_6 [1] : vector<8x4xf32> to vector<8xf32>
    %12 = vector.shape_cast %11 : vector<8xf32> to vector<8x1xf32>
    %13 = tpu.reciprocal %12 {approx = true} : vector<8x1xf32> -> vector<8x1xf32>
    %14 = vector.broadcast %13 : vector<8x1xf32> to vector<8x4xf32>
    %15 = arith.mulf %10, %14 : vector<8x4xf32>
    %16 = tpu.iota {dimensions = array<i32: 1>} : vector<8x4xi32>
    %cst_7 = arith.constant dense<0xFF800000> : vector<8xf32>
    %17 = vector.multi_reduction <maximumf>, %15, %cst_7 [1] : vector<8x4xf32> to vector<8xf32>
    %18 = vector.shape_cast %17 : vector<8xf32> to vector<8x1xf32>
    %19 = vector.broadcast %18 : vector<8x1xf32> to vector<8x4xf32>
    %20 = arith.cmpf oeq, %15, %19 : vector<8x4xf32>
    %c4_i32 = arith.constant 4 : i32
    %21 = vector.broadcast %c4_i32 : i32 to vector<8x4xi32>
    %22 = arith.select %20, %16, %21 : vector<8x4xi1>, vector<8x4xi32>
    %cst_8 = arith.constant dense<2147483647> : vector<8xi32>
    %23 = vector.multi_reduction <minsi>, %22, %cst_8 [1] : vector<8x4xi32> to vector<8xi32>
    %24 = vector.shape_cast %23 : vector<8xi32> to vector<8x1xi32>
    %25 = vector.broadcast %24 : vector<8x1xi32> to vector<8x4xi32>
    %26 = arith.cmpi eq, %16, %25 : vector<8x4xi32>
    %27 = arith.extui %26 : vector<8x4xi1> to vector<8x4xi32>
    %28 = arith.sitofp %27 : vector<8x4xi32> to vector<8x4xf32>
    %29 = arith.mulf %15, %28 : vector<8x4xf32>
    %cst_9 = arith.constant dense<0.000000e+00> : vector<8xf32>
    %30 = vector.multi_reduction <add>, %29, %cst_9 [1] : vector<8x4xf32> to vector<8xf32>
    %31 = vector.shape_cast %30 : vector<8xf32> to vector<8x1xf32>
    %32 = vector.broadcast %31 : vector<8x1xf32> to vector<8x4xf32>
    %33 = arith.mulf %32, %28 : vector<8x4xf32>
    %cst_10 = arith.constant 0.000000e+00 : f32
    %34 = vector.broadcast %cst_10 : f32 to vector<8x4xf32>
    %35 = arith.cmpf one, %33, %34 : vector<8x4xf32>
    %36 = arith.extui %35 : vector<8x4xi1> to vector<8x4xi32>
    %37 = arith.sitofp %36 : vector<8x4xi32> to vector<8x4xf32>
    %c0_11 = arith.constant 0 : index
    %c0_12 = arith.constant 0 : index
    %38 = vector.load %arg9[%c0_11, %c0_12] : memref<8x4xf32, #tpu.memory_space<vmem>>, vector<8x4xf32>
    tpu.vector_store %arg9[%c0_11, %c0_12], %37 {strides = array<i32>} : memref<8x4xf32, #tpu.memory_space<vmem>>, vector<8x4xf32>,
    %cst_13 = arith.constant dense<0.000000e+00> : vector<4xf32>
    %39 = vector.multi_reduction <add>, %28, %cst_13 [0] : vector<8x4xf32> to vector<4xf32>
    %40 = vector.shape_cast %39 : vector<4xf32> to vector<1x4xf32>
    %cst_14 = arith.constant 8.000000e+00 : f32
    %41 = vector.broadcast %cst_14 : f32 to vector<1x4xf32>
    %42 = arith.divf %40, %41 : vector<1x4xf32>
    %cst_15 = arith.constant dense<0.000000e+00> : vector<4xf32>
    %43 = vector.multi_reduction <add>, %15, %cst_15 [0] : vector<8x4xf32> to vector<4xf32>
    %44 = vector.shape_cast %43 : vector<4xf32> to vector<1x4xf32>
    %cst_16 = arith.constant 8.000000e+00 : f32
    %45 = vector.broadcast %cst_16 : f32 to vector<1x4xf32>
    %46 = arith.divf %44, %45 : vector<1x4xf32>
    %47 = arith.mulf %46, %42 : vector<1x4xf32>
    %cst_17 = arith.constant dense<0.000000e+00> : vector<1xf32>
    %48 = vector.multi_reduction <add>, %47, %cst_17 [1] : vector<1x4xf32> to vector<1xf32>
    %49 = vector.shape_cast %48 : vector<1xf32> to vector<1x1xf32>
    %cst_18 = arith.constant 4.000000e+00 : f32
    %50 = vector.broadcast %cst_18 : f32 to vector<1x1xf32>
    %51 = arith.mulf %49, %50 : vector<1x1xf32>
    %c0_19 = arith.constant 0 : index
    %c0_20 = arith.constant 0 : index
    %52 = vector.load %arg10[%c0_19, %c0_20] : memref<1x1xf32, #tpu.memory_space<vmem>>, vector<1x1xf32>
    tpu.vector_store %arg10[%c0_19, %c0_20], %51 {strides = array<i32>} : memref<1x1xf32, #tpu.memory_space<vmem>>, vector<1x1xf32>,
    %cst_21 = arith.constant dense<0.000000e+00> : vector<4xf32>
    %53 = vector.multi_reduction <add>, %28, %cst_21 [0] : vector<8x4xf32> to vector<4xf32>
    %54 = vector.shape_cast %53 : vector<4xf32> to vector<1x4xf32>
    %c0_22 = arith.constant 0 : index
    %c0_23 = arith.constant 0 : index
    %55 = vector.load %arg11[%c0_22, %c0_23] : memref<1x4xf32, #tpu.memory_space<vmem>>, vector<1x4xf32>
    tpu.vector_store %arg11[%c0_22, %c0_23], %54 {strides = array<i32>} : memref<1x4xf32, #tpu.memory_space<vmem>>, vector<1x4xf32>,
    %c0_24 = arith.constant 0 : index
    %c0_25 = arith.constant 0 : index
    %56 = vector.load %arg1[%c0_24, %c0_25] : memref<8x768xf32, #tpu.memory_space<vmem>>, vector<8x768xf32>
    %c0_26 = arith.constant 0 : index
    %c0_27 = arith.constant 0 : index
    %57 = vector.load %arg4[%c0_26, %c0_27] : memref<768x40xf32, #tpu.memory_space<vmem>>, vector<768x40xf32>
    %cst_28 = arith.constant dense<0.000000e+00> : vector<8x40xf32>
    %58 = tpu.matmul %56, %57, %cst_28 {dimension_numbers = #tpu.dot_dimension_numbers<[1], [0], [0], [1], [0, 0, 1, 1], [], []>} : vector<8x768xf32>, vector<768x40xf32>, vector<8x40xf32> -> vector<8x40xf32>
    %c0_29 = arith.constant 0 : index
    %c0_30 = arith.constant 0 : index
    %59 = vector.load %arg5[%c0_29, %c0_30] : memref<1x40xf32, #tpu.memory_space<vmem>>, vector<1x40xf32>
    %60 = vector.broadcast %59 : vector<1x40xf32> to vector<8x40xf32>
    %61 = arith.addf %58, %60 : vector<8x40xf32>
    %c0_31 = arith.constant 0 : index
    %c0_32 = arith.constant 0 : index
    %62 = vector.load %arg6[%c0_31, %c0_32] : memref<4x40xf32, #tpu.memory_space<vmem>>, vector<4x40xf32>
    %cst_33 = arith.constant dense<0.000000e+00> : vector<8x40xf32>
    %63 = tpu.matmul %33, %62, %cst_33 {dimension_numbers = #tpu.dot_dimension_numbers<[1], [0], [0], [1], [0, 0, 1, 1], [], []>} : vector<8x4xf32>, vector<4x40xf32>, vector<8x40xf32> -> vector<8x40xf32>
    %64 = arith.mulf %61, %63 : vector<8x40xf32>
    %c0_34 = arith.constant 0 : index
    %c0_35 = arith.constant 0 : index
    %65 = vector.load %arg7[%c0_34, %c0_35] : memref<40x10xf32, #tpu.memory_space<vmem>>, vector<40x10xf32>
    %cst_36 = arith.constant dense<0.000000e+00> : vector<8x10xf32>
    %66 = tpu.matmul %64, %65, %cst_36 {dimension_numbers = #tpu.dot_dimension_numbers<[1], [0], [0], [1], [0, 0, 1, 1], [], []>} : vector<8x40xf32>, vector<40x10xf32>, vector<8x10xf32> -> vector<8x10xf32>
    %c0_37 = arith.constant 0 : index
    %c0_38 = arith.constant 0 : index
    %67 = vector.load %arg8[%c0_37, %c0_38] : memref<8x10xf32, #tpu.memory_space<vmem>>, vector<8x10xf32>
    tpu.vector_store %arg8[%c0_37, %c0_38], %66 {strides = array<i32>} : memref<8x10xf32, #tpu.memory_space<vmem>>, vector<8x10xf32>,
    return
  }
}

</mosaic_0001>

<llo_original>
// kernel: nonlinear_mixture_res_forward.1
$region0: #{nonlinear_mixture_res_forward.1}
  #allocation0 [shape = 'u32[]', space=smem, size = 0x4, offset = 0x4, fixed_abs, tag = 'smem constant byte address 0x4 - core index']
  #allocation1 [shape = 'u32[144,128]{1,0:T(1,128)}', space=vmem, size = 0x12000, scoped, tag = 'internal scratch']
  %s0 = inlined_call_operand.vmem [shape: f32[8,48], index: 0, kind: input, shape index: {}]
  %s1 = inlined_call_operand.vmem [shape: f32[8,768], index: 1, kind: input, shape index: {}]
  %s2 = inlined_call_operand.vmem [shape: f32[48,4], index: 2, kind: input, shape index: {}]
  %s3 = inlined_call_operand.vmem [shape: f32[1,4], index: 3, kind: input, shape index: {}]
  %s4 = inlined_call_operand.vmem [shape: f32[768,40], index: 4, kind: input, shape index: {}]
  %s5 = inlined_call_operand.vmem [shape: f32[1,40], index: 5, kind: input, shape index: {}]
  %s6 = inlined_call_operand.vmem [shape: f32[4,40], index: 6, kind: input, shape index: {}]
  %s7 = inlined_call_operand.vmem [shape: f32[40,10], index: 7, kind: input, shape index: {}]
  %s8 = inlined_call_operand.hbm [shape: f32[8,10], index: 8, kind: output, shape index: {0}]
  %s9 = inlined_call_operand.vmem [shape: f32[8,4], index: 9, kind: output, shape index: {1}]
  %s10 = inlined_call_operand.hbm [shape: f32[1,1], index: 10, kind: output, shape index: {2}]
  %s11 = inlined_call_operand.hbm [shape: f32[1,4], index: 11, kind: output, shape index: {3}]
  %12 = xla_tuple %s8, %s9, %s10, %s11
  %s13 = sld [smem:[#allocation0]]
  $region66: #{nonlinear_mixture_res_forward.1} parent=0
    _
  %s15 = ssub.s32 1, %s13
  %s16 = scalar_select 0, %s15, %s13
  $region1: #{nonlinear_mixture_res_forward.1} parent=0
    #allocation2 [shape = 'u8[4096]{0}', space=vmem, size = 0x1000, scoped, tag = 'output window, operand 0, single buffered']
    #allocation3 [shape = 's32[1]{0}', space=sflag, size = 0x4, scoped, tag = 'scoped memory for nonlinear_mixture_res_forward.1']
    #allocation4 [shape = 'u8[512]{0}', space=vmem, size = 0x400, scoped, tag = 'output window, operand 2, single buffered']
    #allocation5 [shape = 's32[1]{0}', space=sflag, size = 0x4, scoped, tag = 'scoped memory for nonlinear_mixture_res_forward.1']
    #allocation6 [shape = 'u8[512]{0}', space=vmem, size = 0x400, scoped, tag = 'output window, operand 3, single buffered']
    %17 = vsyncpa [#allocation3], 0
    %18 = vsyncpa [#allocation5], 0
    // Predicated region
    $region2: #{nonlinear_mixture_res_forward.1} parent=1 // pred_check
      _
    $region3: #{nonlinear_mixture_res_forward.1} parent=1 // pred_check_branch
      %20 = sbr.rel (0) target = $region5
    $region4: #{nonlinear_mixture_res_forward.1} parent=1 // pred_region
      _
    $region5: #{nonlinear_mixture_res_forward.1} parent=1 // pred_fallthru
      _
    // Predicated region
    $region6: #{nonlinear_mixture_res_forward.1} parent=1 // pred_check
      _
    $region7: #{nonlinear_mixture_res_forward.1} parent=1 // pred_check_branch
      %22 = sbr.rel (0) target = $region9
    $region8: #{nonlinear_mixture_res_forward.1} parent=1 // pred_region
      _
    $region9: #{nonlinear_mixture_res_forward.1} parent=1 // pred_fallthru
      _
    // Predicated region
    $region10: #{nonlinear_mixture_res_forward.1} parent=1 // pred_check
      _
    $region11: #{nonlinear_mixture_res_forward.1} parent=1 // pred_check_branch
      %24 = sbr.rel (0) target = $region13
    $region12: #{nonlinear_mixture_res_forward.1} parent=1 // pred_region
      _
    $region13: #{nonlinear_mixture_res_forward.1} parent=1 // pred_fallthru
      _
    // Predicated region
    $region14: #{nonlinear_mixture_res_forward.1} parent=1 // pred_check
      _
    $region15: #{nonlinear_mixture_res_forward.1} parent=1 // pred_check_branch
      %26 = sbr.rel (0) target = $region17
    $region16: #{nonlinear_mixture_res_forward.1} parent=1 // pred_region
      _
    $region17: #{nonlinear_mixture_res_forward.1} parent=1 // pred_fallthru
      _
    // Predicated region
    $region18: #{nonlinear_mixture_res_forward.1} parent=1 // pred_check
      _
    $region19: #{nonlinear_mixture_res_forward.1} parent=1 // pred_check_branch
      %28 = sbr.rel (0) target = $region21
    $region20: #{nonlinear_mixture_res_forward.1} parent=1 // pred_region
      _
    $region21: #{nonlinear_mixture_res_forward.1} parent=1 // pred_fallthru
      _
    // Predicated region
    $region22: #{nonlinear_mixture_res_forward.1} parent=1 // pred_check
      _
    $region23: #{nonlinear_mixture_res_forward.1} parent=1 // pred_check_branch
      %30 = sbr.rel (0) target = $region25
    $region24: #{nonlinear_mixture_res_forward.1} parent=1 // pred_region
      _
    $region25: #{nonlinear_mixture_res_forward.1} parent=1 // pred_fallthru
      _
    // Predicated region
    $region26: #{nonlinear_mixture_res_forward.1} parent=1 // pred_check
      _
    $region27: #{nonlinear_mixture_res_forward.1} parent=1 // pred_check_branch
      %32 = sbr.rel (0) target = $region29
    $region28: #{nonlinear_mixture_res_forward.1} parent=1 // pred_region
      _
    $region29: #{nonlinear_mixture_res_forward.1} parent=1 // pred_fallthru
      _
    // Predicated region
    $region30: #{nonlinear_mixture_res_forward.1} parent=1 // pred_check
      _
    $region31: #{nonlinear_mixture_res_forward.1} parent=1 // pred_check_branch
      %34 = sbr.rel (0) target = $region33
    $region32: #{nonlinear_mixture_res_forward.1} parent=1 // pred_region
      _
    $region33: #{nonlinear_mixture_res_forward.1} parent=1 // pred_fallthru
      _
    %v35 = vld [vmem:[%s0] sm:$0xff]
    %v36 = vld [vmem:[%s2] sm:$0xff]
    %v37 = vld [vmem:[%s2 + $0x8] sm:$0xff]
    %v38 = vld [vmem:[%s2 + $0x10] sm:$0xff]
    %v39 = vld [vmem:[%s2 + $0x18] sm:$0xff]
    %v40 = vld [vmem:[%s2 + $0x20] sm:$0xff]
    %v41 = vld [vmem:[%s2 + $0x28] sm:$0xff]
    %v42 = vld [vmem:[%s3] sm:$0x1]
    %v44 = vlaneseq
    %v45 = vshrl.u32 %v44, 7
    %v46 = vsub.s32 0, %v45
    %v47 = vrot.slane %v42, %v46
    %vm49 = vcmask 392192
    %v51 = vsel %vm49, %v35, 0
    %53 = vmatprep.subr.mxu0 0.0
    %54 = vmatpush1.msra.mxu0 %v36
    %55 = vmatprep.subr.mxu0 0.0
    %56 = vmatpush1.msra.mxu0 %v37
    %57 = vmatprep.subr.mxu0 0.0
    %58 = vmatpush1.msra.mxu0 %v38
    %59 = vmatprep.subr.mxu0 0.0
    %60 = vmatpush1.msra.mxu0 %v39
    %61 = vmatprep.subr.mxu0 0.0
    %62 = vmatpush1.msra.mxu0 %v40
    %63 = vmatprep.subr.mxu0 0.0
    %64 = vmatpush1.msra.mxu0 %v41
    %65 = vmatprep.subr.mxu0 0.0
    %66 = vmatpush1.msra.mxu0 0.0
    %67 = vmatprep.subr.mxu0 0.0
    %68 = vmatpush1.msra.mxu0 0.0
    %69 = vmatprep.subr.mxu0 0.0
    %70 = vmatpush1.msra.mxu0 0.0
    %71 = vmatprep.subr.mxu0 0.0
    %72 = vmatpush1.msra.mxu0 0.0
    %73 = vmatprep.subr.mxu0 0.0
    %74 = vmatpush1.msra.mxu0 0.0
    %75 = vmatprep.subr.mxu0 0.0
    %76 = vmatpush1.msra.mxu0 0.0
    %77 = vmatprep.subr.mxu0 0.0
    %78 = vmatpush1.msra.mxu0 0.0
    %79 = vmatprep.subr.mxu0 0.0
    %80 = vmatpush1.msra.mxu0 0.0
    %81 = vmatprep.subr.mxu0 0.0
    %82 = vmatpush1.msra.mxu0 0.0
    %83 = vmatprep.subr.mxu0 0.0
    %84 = vmatpush1.msra.mxu0 0.0
    %85 = vmatprep.subr.mxu0 0.0
    %86 = vmatpush1.msra.mxu0 0.0
    %87 = vmatprep.subr.mxu0 0.0
    %88 = vmatpush1.msra.mxu0 0.0
    %89 = vmatprep.subr.mxu0 0.0
    %90 = vmatpush1.msra.mxu0 0.0
    %91 = vmatprep.subr.mxu0 0.0
    %92 = vmatpush1.msra.mxu0 0.0
    %93 = vmatprep.subr.mxu0 0.0
    %94 = vmatpush1.msra.mxu0 0.0
    %95 = vmatprep.subr.mxu0 0.0
    %96 = vmatpush1.msra.mxu0 0.0
    %97 = vmatprep.subr.mxu0 0.0
    %98 = vmatpush1.msra.mxu0 0.0
    %99 = vmatprep.subr.mxu0 0.0
    %100 = vmatpush1.msra.mxu0 0.0
    %101 = vmatprep.subr.mxu0 0.0
    %102 = vmatpush1.msra.mxu0 0.0
    %103 = vmatprep.subr.mxu0 0.0
    %104 = vmatpush1.msra.mxu0 0.0
    %105 = vmatprep.subr.mxu0 0.0
    %106 = vmatpush1.msra.mxu0 0.0
    %107 = vmatprep.subr.mxu0 0.0
    %108 = vmatpush1.msra.mxu0 0.0
    %109 = vmatprep.subr.mxu0 0.0
    %110 = vmatpush1.msra.mxu0 0.0
    %111 = vmatprep.subr.mxu0 0.0
    %112 = vmatpush1.msra.mxu0 0.0
    %113 = vmatprep.subr.mxu0 0.0
    %114 = vmatpush1.msra.mxu0 0.0
    %115 = vmatprep.subr.mxu0 0.0
    %116 = vmatpush1.msra.mxu0 0.0
    %117 = vmatprep.mubr.f32.mxu0 0.0
    %118 = vmatmul.mubr.f32.gmra.mrb[0].mxu0 %v51
    %v119 = vpop.f32.mrb[0].mxu0
    %v120 = vadd.f32 %v47, %v119
    %v121 = vpop.f32.mrb[0].mxu0
    %122 = vdwg.mxu0
    %vm123 = vcmask 31744
    %v124 = vsel %vm123, %v120, -inf
    %125 = vmax.xlane.f32.xlu0 %v124
    %v126 = vpop.xlane.xlu0 %125
    %v127 = vsub.f32 %v120, %v126
    %v128 = vmul.f32 %v127, 1.442695
    %v129 = vpow.pop %v128
    %v130 = vsel %vm123, %v129, 0.0
    %131 = vadd.xlane.f32.xlu0 %v130
    %v132 = vpop.xlane.xlu0 %131
    %v133 = vrcp.pop %v132
    %v134 = vmul.f32 %v129, %v133
    %v135 = vlaneseq
    %v136 = vand.u32 %v135, 127
    %v137 = vsel %vm123, %v134, -inf
    %138 = vmax.xlane.f32.xlu0 %v137
    %v139 = vpop.xlane.xlu0 %138
    %vm140 = vcmp.eq.f32.partialorder %v134, %v139
    %v141 = vsel %vm140, %v136, 4
    %v142 = vsel %vm123, %v141, 2147483647
    %v143 = vand.u32 %v142, 65535
    %v144 = vshra.s32 %v142, 16
    %v145 = vcvt.s32.f32 %v143
    %v146 = vcvt.s32.f32 %v144
    %147 = vmin.xlane.f32.xlu0 %v146
    %v148 = vpop.xlane.xlu0 %147
    %vm149 = vcmp.eq.f32.partialorder %v146, %v148
    %v150 = vsel %vm149, %v145, inf
    %151 = vmin.xlane.f32.xlu0 %v150
    %v152 = vpop.xlane.xlu0 %151
    %v153 = vcvt.f32.s32 %v152
    %v154 = vcvt.f32.s32 %v148
    %v155 = vshll.u32 %v154, 16
    %v156 = vadd.s32 %v155, %v153
    %vm157 = vcmp.eq.s32.totalorder %v136, %v156
    %v158 = vsel %vm157, 1, 0
    %v159 = vcvt.s32.f32 %v158
    %v160 = vmul.f32 %v134, %v159
    %v161 = vsel %vm123, %v160, 0.0
    %162 = vadd.xlane.f32.xlu0 %v161
    %v163 = vpop.xlane.xlu0 %162
    %v164 = vmul.f32 %v163, %v159
    %vm165 = vcmp.ne.f32.partialorder %v164, 0.0
    %v166 = vsel %vm165, 1, 0
    %v167 = vcvt.s32.f32 %v166
    %168 = vst.msk [vmem:[%s9] sm:$0xff] %vm123, %v167
    %v169 = vsel %vm123, %v159, 0.0
    %v170 = vrot.slane %v169, 4
    %v171 = vadd.f32 %v169, %v170
    %v172 = vrot.slane %v171, 2
    %v173 = vadd.f32 %v171, %v172
    %v174 = vrot.slane %v173, 1
    %v175 = vadd.f32 %v173, %v174
    %v176 = vrcp.pop 8.0
    %v177 = vmul.f32 %v175, %v176
    %v178 = vsel %vm123, %v134, 0.0
    %v179 = vrot.slane %v178, 4
    %v180 = vadd.f32 %v178, %v179
    %v181 = vrot.slane %v180, 2
    %v182 = vadd.f32 %v180, %v181
    %v183 = vrot.slane %v182, 1
    %v184 = vadd.f32 %v182, %v183
    %v185 = vmul.f32 %v184, %v176
    %v186 = vmul.f32 %v185, %v177
    %v187 = vsel %vm123, %v186, 0.0
    %188 = vadd.xlane.f32.xlu0 %v187
    %v189 = vpop.xlane.xlu0 %188
    %v190 = vmul.f32 %v189, 4.0
    %vm191 = vcmask 0
    %192 = vst.msk [vmem:[#allocation4] sm:$0x1] %vm191, %v190
    %vm193 = vcmask 24576
    %194 = vst.msk [vmem:[#allocation6] sm:$0x1] %vm193, %v175
    %v195 = vld [vmem:[%s1] sm:$0xff]
    %v196 = vld [vmem:[%s1 + $0x8] sm:$0xff]
    %v197 = vld [vmem:[%s1 + $0x10] sm:$0xff]
    %v198 = vld [vmem:[%s1 + $0x18] sm:$0xff]
    %v199 = vld [vmem:[%s1 + $0x20] sm:$0xff]
    %v200 = vld [vmem:[%s1 + $0x28] sm:$0xff]
    %v201 = vld [vmem:[%s4] sm:$0xff]
    %v202 = vld [vmem:[%s4 + $0x8] sm:$0xff]
    %v203 = vld [vmem:[%s4 + $0x10] sm:$0xff]
    %v204 = vld [vmem:[%s4 + $0x18] sm:$0xff]
    %v205 = vld [vmem:[%s4 + $0x20] sm:$0xff]
    %v206 = vld [vmem:[%s4 + $0x28] sm:$0xff]
    %v207 = vld [vmem:[%s4 + $0x30] sm:$0xff]
    %v208 = vld [vmem:[%s4 + $0x38] sm:$0xff]
    %v209 = vld [vmem:[%s4 + $0x40] sm:$0xff]
    %v210 = vld [vmem:[%s4 + $0x48] sm:$0xff]
    %v211 = vld [vmem:[%s4 + $0x50] sm:$0xff]
    %v212 = vld [vmem:[%s4 + $0x58] sm:$0xff]
    %v213 = vld [vmem:[%s4 + $0x60] sm:$0xff]
    %v214 = vld [vmem:[%s4 + $0x68] sm:$0xff]
    %v215 = vld [vmem:[%s4 + $0x70] sm:$0xff]
    %v216 = vld [vmem:[%s4 + $0x78] sm:$0xff]
    %v217 = vld [vmem:[%s4 + $0x80] sm:$0xff]
    %v218 = vld [vmem:[%s4 + $0x88] sm:$0xff]
    %v219 = vld [vmem:[%s4 + $0x90] sm:$0xff]
    %v220 = vld [vmem:[%s4 + $0x98] sm:$0xff]
    %v221 = vld [vmem:[%s4 + $0xa0] sm:$0xff]
    %v222 = vld [vmem:[%s4 + $0xa8] sm:$0xff]
    %v223 = vld [vmem:[%s4 + $0xb0] sm:$0xff]
    %v224 = vld [vmem:[%s4 + $0xb8] sm:$0xff]
    %v225 = vld [vmem:[%s4 + $0xc0] sm:$0xff]
    %v226 = vld [vmem:[%s4 + $0xc8] sm:$0xff]
    %v227 = vld [vmem:[%s4 + $0xd0] sm:$0xff]
    %v228 = vld [vmem:[%s4 + $0xd8] sm:$0xff]
    %v229 = vld [vmem:[%s4 + $0xe0] sm:$0xff]
    %v230 = vld [vmem:[%s4 + $0xe8] sm:$0xff]
    %v231 = vld [vmem:[%s4 + $0xf0] sm:$0xff]
    %v232 = vld [vmem:[%s4 + $0xf8] sm:$0xff]
    %v233 = vld [vmem:[%s4 + $0x100] sm:$0xff]
    %v234 = vld [vmem:[%s4 + $0x108] sm:$0xff]
    %v235 = vld [vmem:[%s4 + $0x110] sm:$0xff]
    %v236 = vld [vmem:[%s4 + $0x118] sm:$0xff]
    %v237 = vld [vmem:[%s4 + $0x120] sm:$0xff]
    %v238 = vld [vmem:[%s4 + $0x128] sm:$0xff]
    %v239 = vld [vmem:[%s4 + $0x130] sm:$0xff]
    %v240 = vld [vmem:[%s4 + $0x138] sm:$0xff]
    %v241 = vld [vmem:[%s4 + $0x140] sm:$0xff]
    %v242 = vld [vmem:[%s4 + $0x148] sm:$0xff]
    %v243 = vld [vmem:[%s4 + $0x150] sm:$0xff]
    %v244 = vld [vmem:[%s4 + $0x158] sm:$0xff]
    %v245 = vld [vmem:[%s4 + $0x160] sm:$0xff]
    %v246 = vld [vmem:[%s4 + $0x168] sm:$0xff]
    %v247 = vld [vmem:[%s4 + $0x170] sm:$0xff]
    %v248 = vld [vmem:[%s4 + $0x178] sm:$0xff]
    %v249 = vld [vmem:[%s4 + $0x180] sm:$0xff]
    %v250 = vld [vmem:[%s4 + $0x188] sm:$0xff]
    %v251 = vld [vmem:[%s4 + $0x190] sm:$0xff]
    %v252 = vld [vmem:[%s4 + $0x198] sm:$0xff]
    %v253 = vld [vmem:[%s4 + $0x1a0] sm:$0xff]
    %v254 = vld [vmem:[%s4 + $0x1a8] sm:$0xff]
    %v255 = vld [vmem:[%s4 + $0x1b0] sm:$0xff]
    %v256 = vld [vmem:[%s4 + $0x1b8] sm:$0xff]
    %v257 = vld [vmem:[%s4 + $0x1c0] sm:$0xff]
    %v258 = vld [vmem:[%s4 + $0x1c8] sm:$0xff]
    %v259 = vld [vmem:[%s4 + $0x1d0] sm:$0xff]
    %v260 = vld [vmem:[%s4 + $0x1d8] sm:$0xff]
    %v261 = vld [vmem:[%s4 + $0x1e0] sm:$0xff]
    %v262 = vld [vmem:[%s4 + $0x1e8] sm:$0xff]
    %v263 = vld [vmem:[%s4 + $0x1f0] sm:$0xff]
    %v264 = vld [vmem:[%s4 + $0x1f8] sm:$0xff]
    %v265 = vld [vmem:[%s4 + $0x200] sm:$0xff]
    %v266 = vld [vmem:[%s4 + $0x208] sm:$0xff]
    %v267 = vld [vmem:[%s4 + $0x210] sm:$0xff]
    %v268 = vld [vmem:[%s4 + $0x218] sm:$0xff]
    %v269 = vld [vmem:[%s4 + $0x220] sm:$0xff]
    %v270 = vld [vmem:[%s4 + $0x228] sm:$0xff]
    %v271 = vld [vmem:[%s4 + $0x230] sm:$0xff]
    %v272 = vld [vmem:[%s4 + $0x238] sm:$0xff]
    %v273 = vld [vmem:[%s4 + $0x240] sm:$0xff]
    %v274 = vld [vmem:[%s4 + $0x248] sm:$0xff]
    %v275 = vld [vmem:[%s4 + $0x250] sm:$0xff]
    %v276 = vld [vmem:[%s4 + $0x258] sm:$0xff]
    %v277 = vld [vmem:[%s4 + $0x260] sm:$0xff]
    %v278 = vld [vmem:[%s4 + $0x268] sm:$0xff]
    %v279 = vld [vmem:[%s4 + $0x270] sm:$0xff]
    %v280 = vld [vmem:[%s4 + $0x278] sm:$0xff]
    %v281 = vld [vmem:[%s4 + $0x280] sm:$0xff]
    %v282 = vld [vmem:[%s4 + $0x288] sm:$0xff]
    %v283 = vld [vmem:[%s4 + $0x290] sm:$0xff]
    %v284 = vld [vmem:[%s4 + $0x298] sm:$0xff]
    %v285 = vld [vmem:[%s4 + $0x2a0] sm:$0xff]
    %v286 = vld [vmem:[%s4 + $0x2a8] sm:$0xff]
    %v287 = vld [vmem:[%s4 + $0x2b0] sm:$0xff]
    %v288 = vld [vmem:[%s4 + $0x2b8] sm:$0xff]
    %v289 = vld [vmem:[%s4 + $0x2c0] sm:$0xff]
    %v290 = vld [vmem:[%s4 + $0x2c8] sm:$0xff]
    %v291 = vld [vmem:[%s4 + $0x2d0] sm:$0xff]
    %v292 = vld [vmem:[%s4 + $0x2d8] sm:$0xff]
    %v293 = vld [vmem:[%s4 + $0x2e0] sm:$0xff]
    %v294 = vld [vmem:[%s4 + $0x2e8] sm:$0xff]
    %v295 = vld [vmem:[%s4 + $0x2f0] sm:$0xff]
    %v296 = vld [vmem:[%s4 + $0x2f8] sm:$0xff]
    %v297 = vld [vmem:[%s5] sm:$0x1]
    %v299 = vlaneseq
    %v300 = vshrl.u32 %v299, 7
    %v301 = vsub.s32 0, %v300
    %v302 = vrot.slane %v297, %v301
    %304 = vmatprep.subr.mxu0 0.0
    %305 = vmatpush1.msra.mxu0 %v201
    %306 = vmatprep.subr.mxu0 0.0
    %307 = vmatpush1.msra.mxu0 %v202
    %308 = vmatprep.subr.mxu0 0.0
    %309 = vmatpush1.msra.mxu0 %v203
    %310 = vmatprep.subr.mxu0 0.0
    %311 = vmatpush1.msra.mxu0 %v204
    %312 = vmatprep.subr.mxu0 0.0
    %313 = vmatpush1.msra.mxu0 %v205
    %314 = vmatprep.subr.mxu0 0.0
    %315 = vmatpush1.msra.mxu0 %v206
    %316 = vmatprep.subr.mxu0 0.0
    %317 = vmatpush1.msra.mxu0 %v207
    %318 = vmatprep.subr.mxu0 0.0
    %319 = vmatpush1.msra.mxu0 %v208
    %320 = vmatprep.subr.mxu0 0.0
    %321 = vmatpush1.msra.mxu0 %v209
    %322 = vmatprep.subr.mxu0 0.0
    %323 = vmatpush1.msra.mxu0 %v210
    %324 = vmatprep.subr.mxu0 0.0
    %325 = vmatpush1.msra.mxu0 %v211
    %326 = vmatprep.subr.mxu0 0.0
    %327 = vmatpush1.msra.mxu0 %v212
    %328 = vmatprep.subr.mxu0 0.0
    %329 = vmatpush1.msra.mxu0 %v213
    %330 = vmatprep.subr.mxu0 0.0
    %331 = vmatpush1.msra.mxu0 %v214
    %332 = vmatprep.subr.mxu0 0.0
    %333 = vmatpush1.msra.mxu0 %v215
    %334 = vmatprep.subr.mxu0 0.0
    %335 = vmatpush1.msra.mxu0 %v216
    %336 = vmatprep.subr.mxu0 0.0
    %337 = vmatpush1.msra.mxu0 %v217
    %338 = vmatprep.subr.mxu0 0.0
    %339 = vmatpush1.msra.mxu0 %v218
    %340 = vmatprep.subr.mxu0 0.0
    %341 = vmatpush1.msra.mxu0 %v219
    %342 = vmatprep.subr.mxu0 0.0
    %343 = vmatpush1.msra.mxu0 %v220
    %344 = vmatprep.subr.mxu0 0.0
    %345 = vmatpush1.msra.mxu0 %v221
    %346 = vmatprep.subr.mxu0 0.0
    %347 = vmatpush1.msra.mxu0 %v222
    %348 = vmatprep.subr.mxu0 0.0
    %349 = vmatpush1.msra.mxu0 %v223
    %350 = vmatprep.subr.mxu0 0.0
    %351 = vmatpush1.msra.mxu0 %v224
    %352 = vmatprep.subr.mxu0 0.0
    %353 = vmatpush1.msra.mxu0 %v225
    %354 = vmatprep.subr.mxu0 0.0
    %355 = vmatpush1.msra.mxu0 %v226
    %356 = vmatprep.subr.mxu0 0.0
    %357 = vmatpush1.msra.mxu0 %v227
    %358 = vmatprep.subr.mxu0 0.0
    %359 = vmatpush1.msra.mxu0 %v228
    %360 = vmatprep.subr.mxu0 0.0
    %361 = vmatpush1.msra.mxu0 %v229
    %362 = vmatprep.subr.mxu0 0.0
    %363 = vmatpush1.msra.mxu0 %v230
    %364 = vmatprep.subr.mxu0 0.0
    %365 = vmatpush1.msra.mxu0 %v231
    %366 = vmatprep.subr.mxu0 0.0
    %367 = vmatpush1.msra.mxu0 %v232
    %368 = vmatprep.mubr.f32.mxu0 %v196
    %369 = vmatmul.mubr.f32.gmra.mrb[0].mxu0 %v195
    %v370 = vpop.f32.mrb[0].mxu0
    %v371 = vadd.f32 %v302, %v370
    %v372 = vpop.f32.mrb[0].mxu0
    %373 = vdwg.mxu0
    %374 = vmatprep.subr.mxu0 0.0
    %375 = vmatpush1.msra.mxu0 %v233
    %376 = vmatprep.subr.mxu0 0.0
    %377 = vmatpush1.msra.mxu0 %v234
    %378 = vmatprep.subr.mxu0 0.0
    %379 = vmatpush1.msra.mxu0 %v235
    %380 = vmatprep.subr.mxu0 0.0
    %381 = vmatpush1.msra.mxu0 %v236
    %382 = vmatprep.subr.mxu0 0.0
    %383 = vmatpush1.msra.mxu0 %v237
    %384 = vmatprep.subr.mxu0 0.0
    %385 = vmatpush1.msra.mxu0 %v238
    %386 = vmatprep.subr.mxu0 0.0
    %387 = vmatpush1.msra.mxu0 %v239
    %388 = vmatprep.subr.mxu0 0.0
    %389 = vmatpush1.msra.mxu0 %v240
    %390 = vmatprep.subr.mxu0 0.0
    %391 = vmatpush1.msra.mxu0 %v241
    %392 = vmatprep.subr.mxu0 0.0
    %393 = vmatpush1.msra.mxu0 %v242
    %394 = vmatprep.subr.mxu0 0.0
    %395 = vmatpush1.msra.mxu0 %v243
    %396 = vmatprep.subr.mxu0 0.0
    %397 = vmatpush1.msra.mxu0 %v244
    %398 = vmatprep.subr.mxu0 0.0
    %399 = vmatpush1.msra.mxu0 %v245
    %400 = vmatprep.subr.mxu0 0.0
    %401 = vmatpush1.msra.mxu0 %v246
    %402 = vmatprep.subr.mxu0 0.0
    %403 = vmatpush1.msra.mxu0 %v247
    %404 = vmatprep.subr.mxu0 0.0
    %405 = vmatpush1.msra.mxu0 %v248
    %406 = vmatprep.subr.mxu0 0.0
    %407 = vmatpush1.msra.mxu0 %v249
    %408 = vmatprep.subr.mxu0 0.0
    %409 = vmatpush1.msra.mxu0 %v250
    %410 = vmatprep.subr.mxu0 0.0
    %411 = vmatpush1.msra.mxu0 %v251
    %412 = vmatprep.subr.mxu0 0.0
    %413 = vmatpush1.msra.mxu0 %v252
    %414 = vmatprep.subr.mxu0 0.0
    %415 = vmatpush1.msra.mxu0 %v253
    %416 = vmatprep.subr.mxu0 0.0
    %417 = vmatpush1.msra.mxu0 %v254
    %418 = vmatprep.subr.mxu0 0.0
    %419 = vmatpush1.msra.mxu0 %v255
    %420 = vmatprep.subr.mxu0 0.0
    %421 = vmatpush1.msra.mxu0 %v256
    %422 = vmatprep.subr.mxu0 0.0
    %423 = vmatpush1.msra.mxu0 %v257
    %424 = vmatprep.subr.mxu0 0.0
    %425 = vmatpush1.msra.mxu0 %v258
    %426 = vmatprep.subr.mxu0 0.0
    %427 = vmatpush1.msra.mxu0 %v259
    %428 = vmatprep.subr.mxu0 0.0
    %429 = vmatpush1.msra.mxu0 %v260
    %430 = vmatprep.subr.mxu0 0.0
    %431 = vmatpush1.msra.mxu0 %v261
    %432 = vmatprep.subr.mxu0 0.0
    %433 = vmatpush1.msra.mxu0 %v262
    %434 = vmatprep.subr.mxu0 0.0
    %435 = vmatpush1.msra.mxu0 %v263
    %436 = vmatprep.subr.mxu0 0.0
    %437 = vmatpush1.msra.mxu0 %v264
    %438 = vmatprep.mubr.f32.mxu0 %v198
    %439 = vmatmul.mubr.f32.gmra.mrb[0].mxu0 %v197
    %v440 = vpop.f32.mrb[0].mxu0
    %v441 = vadd.f32 %v371, %v440
    %v442 = vpop.f32.mrb[0].mxu0
    %443 = vdwg.mxu0
    %444 = vmatprep.subr.mxu0 0.0
    %445 = vmatpush1.msra.mxu0 %v265
    %446 = vmatprep.subr.mxu0 0.0
    %447 = vmatpush1.msra.mxu0 %v266
    %448 = vmatprep.subr.mxu0 0.0
    %449 = vmatpush1.msra.mxu0 %v267
    %450 = vmatprep.subr.mxu0 0.0
    %451 = vmatpush1.msra.mxu0 %v268
    %452 = vmatprep.subr.mxu0 0.0
    %453 = vmatpush1.msra.mxu0 %v269
    %454 = vmatprep.subr.mxu0 0.0
    %455 = vmatpush1.msra.mxu0 %v270
    %456 = vmatprep.subr.mxu0 0.0
    %457 = vmatpush1.msra.mxu0 %v271
    %458 = vmatprep.subr.mxu0 0.0
    %459 = vmatpush1.msra.mxu0 %v272
    %460 = vmatprep.subr.mxu0 0.0
    %461 = vmatpush1.msra.mxu0 %v273
    %462 = vmatprep.subr.mxu0 0.0
    %463 = vmatpush1.msra.mxu0 %v274
    %464 = vmatprep.subr.mxu0 0.0
    %465 = vmatpush1.msra.mxu0 %v275
    %466 = vmatprep.subr.mxu0 0.0
    %467 = vmatpush1.msra.mxu0 %v276
    %468 = vmatprep.subr.mxu0 0.0
    %469 = vmatpush1.msra.mxu0 %v277
    %470 = vmatprep.subr.mxu0 0.0
    %471 = vmatpush1.msra.mxu0 %v278
    %472 = vmatprep.subr.mxu0 0.0
    %473 = vmatpush1.msra.mxu0 %v279
    %474 = vmatprep.subr.mxu0 0.0
    %475 = vmatpush1.msra.mxu0 %v280
    %476 = vmatprep.subr.mxu0 0.0
    %477 = vmatpush1.msra.mxu0 %v281
    %478 = vmatprep.subr.mxu0 0.0
    %479 = vmatpush1.msra.mxu0 %v282
    %480 = vmatprep.subr.mxu0 0.0
    %481 = vmatpush1.msra.mxu0 %v283
    %482 = vmatprep.subr.mxu0 0.0
    %483 = vmatpush1.msra.mxu0 %v284
    %484 = vmatprep.subr.mxu0 0.0
    %485 = vmatpush1.msra.mxu0 %v285
    %486 = vmatprep.subr.mxu0 0.0
    %487 = vmatpush1.msra.mxu0 %v286
    %488 = vmatprep.subr.mxu0 0.0
    %489 = vmatpush1.msra.mxu0 %v287
    %490 = vmatprep.subr.mxu0 0.0
    %491 = vmatpush1.msra.mxu0 %v288
    %492 = vmatprep.subr.mxu0 0.0
    %493 = vmatpush1.msra.mxu0 %v289
    %494 = vmatprep.subr.mxu0 0.0
    %495 = vmatpush1.msra.mxu0 %v290
    %496 = vmatprep.subr.mxu0 0.0
    %497 = vmatpush1.msra.mxu0 %v291
    %498 = vmatprep.subr.mxu0 0.0
    %499 = vmatpush1.msra.mxu0 %v292
    %500 = vmatprep.subr.mxu0 0.0
    %501 = vmatpush1.msra.mxu0 %v293
    %502 = vmatprep.subr.mxu0 0.0
    %503 = vmatpush1.msra.mxu0 %v294
    %504 = vmatprep.subr.mxu0 0.0
    %505 = vmatpush1.msra.mxu0 %v295
    %506 = vmatprep.subr.mxu0 0.0
    %507 = vmatpush1.msra.mxu0 %v296
    %508 = vmatprep.mubr.f32.mxu0 %v200
    %509 = vmatmul.mubr.f32.gmra.mrb[0].mxu0 %v199
    %v510 = vpop.f32.mrb[0].mxu0
    %v511 = vadd.f32 %v441, %v510
    %v512 = vpop.f32.mrb[0].mxu0
    %513 = vdwg.mxu0
    %v514 = vld [vmem:[%s6] sm:$0xf]
    %v516 = vsel %vm123, %v164, 0
    %vm518 = vcmask 1043456
    %v520 = vsel %vm518, %v514, 0
    %522 = vmatprep.subr.mxu0 0.0
    %523 = vmatpush1.msra.mxu0 %v520
    %524 = vmatprep.subr.mxu0 0.0
    %525 = vmatpush1.msra.mxu0 0.0
    %526 = vmatprep.subr.mxu0 0.0
    %527 = vmatpush1.msra.mxu0 0.0
    %528 = vmatprep.subr.mxu0 0.0
    %529 = vmatpush1.msra.mxu0 0.0
    %530 = vmatprep.subr.mxu0 0.0
    %531 = vmatpush1.msra.mxu0 0.0
    %532 = vmatprep.subr.mxu0 0.0
    %533 = vmatpush1.msra.mxu0 0.0
    %534 = vmatprep.subr.mxu0 0.0
    %535 = vmatpush1.msra.mxu0 0.0
    %536 = vmatprep.subr.mxu0 0.0
    %537 = vmatpush1.msra.mxu0 0.0
    %538 = vmatprep.subr.mxu0 0.0
    %539 = vmatpush1.msra.mxu0 0.0
    %540 = vmatprep.subr.mxu0 0.0
    %541 = vmatpush1.msra.mxu0 0.0
    %542 = vmatprep.subr.mxu0 0.0
    %543 = vmatpush1.msra.mxu0 0.0
    %544 = vmatprep.subr.mxu0 0.0
    %545 = vmatpush1.msra.mxu0 0.0
    %546 = vmatprep.subr.mxu0 0.0
    %547 = vmatpush1.msra.mxu0 0.0
    %548 = vmatprep.subr.mxu0 0.0
    %549 = vmatpush1.msra.mxu0 0.0
    %550 = vmatprep.subr.mxu0 0.0
    %551 = vmatpush1.msra.mxu0 0.0
    %552 = vmatprep.subr.mxu0 0.0
    %553 = vmatpush1.msra.mxu0 0.0
    %554 = vmatprep.subr.mxu0 0.0
    %555 = vmatpush1.msra.mxu0 0.0
    %556 = vmatprep.subr.mxu0 0.0
    %557 = vmatpush1.msra.mxu0 0.0
    %558 = vmatprep.subr.mxu0 0.0
    %559 = vmatpush1.msra.mxu0 0.0
    %560 = vmatprep.subr.mxu0 0.0
    %561 = vmatpush1.msra.mxu0 0.0
    %562 = vmatprep.subr.mxu0 0.0
    %563 = vmatpush1.msra.mxu0 0.0
    %564 = vmatprep.subr.mxu0 0.0
    %565 = vmatpush1.msra.mxu0 0.0
    %566 = vmatprep.subr.mxu0 0.0
    %567 = vmatpush1.msra.mxu0 0.0
    %568 = vmatprep.subr.mxu0 0.0
    %569 = vmatpush1.msra.mxu0 0.0
    %570 = vmatprep.subr.mxu0 0.0
    %571 = vmatpush1.msra.mxu0 0.0
    %572 = vmatprep.subr.mxu0 0.0
    %573 = vmatpush1.msra.mxu0 0.0
    %574 = vmatprep.subr.mxu0 0.0
    %575 = vmatpush1.msra.mxu0 0.0
    %576 = vmatprep.subr.mxu0 0.0
    %577 = vmatpush1.msra.mxu0 0.0
    %578 = vmatprep.subr.mxu0 0.0
    %579 = vmatpush1.msra.mxu0 0.0
    %580 = vmatprep.subr.mxu0 0.0
    %581 = vmatpush1.msra.mxu0 0.0
    %582 = vmatprep.subr.mxu0 0.0
    %583 = vmatpush1.msra.mxu0 0.0
    %584 = vmatprep.subr.mxu0 0.0
    %585 = vmatpush1.msra.mxu0 0.0
    %586 = vmatprep.mubr.f32.mxu0 0.0
    %587 = vmatmul.mubr.f32.gmra.mrb[0].mxu0 %v516
    %v588 = vpop.f32.mrb[0].mxu0
    %v589 = vadd.f32 0.0, %v588
    %v590 = vpop.f32.mrb[0].mxu0
    %591 = vdwg.mxu0
    %v592 = vmul.f32 %v511, %v589
    %v593 = vld [vmem:[%s7] sm:$0xff]
    %v594 = vld [vmem:[%s7 + $0x8] sm:$0xff]
    %v595 = vld [vmem:[%s7 + $0x10] sm:$0xff]
    %v596 = vld [vmem:[%s7 + $0x18] sm:$0xff]
    %v597 = vld [vmem:[%s7 + $0x20] sm:$0xff]
    %vm598 = vcmask 326656
    %v600 = vsel %vm598, %v592, 0
    %602 = vmatprep.subr.mxu0 0.0
    %603 = vmatpush1.msra.mxu0 %v593
    %604 = vmatprep.subr.mxu0 0.0
    %605 = vmatpush1.msra.mxu0 %v594
    %606 = vmatprep.subr.mxu0 0.0
    %607 = vmatpush1.msra.mxu0 %v595
    %608 = vmatprep.subr.mxu0 0.0
    %609 = vmatpush1.msra.mxu0 %v596
    %610 = vmatprep.subr.mxu0 0.0
    %611 = vmatpush1.msra.mxu0 %v597
    %612 = vmatprep.subr.mxu0 0.0
    %613 = vmatpush1.msra.mxu0 0.0
    %614 = vmatprep.subr.mxu0 0.0
    %615 = vmatpush1.msra.mxu0 0.0
    %616 = vmatprep.subr.mxu0 0.0
    %617 = vmatpush1.msra.mxu0 0.0
    %618 = vmatprep.subr.mxu0 0.0
    %619 = vmatpush1.msra.mxu0 0.0
    %620 = vmatprep.subr.mxu0 0.0
    %621 = vmatpush1.msra.mxu0 0.0
    %622 = vmatprep.subr.mxu0 0.0
    %623 = vmatpush1.msra.mxu0 0.0
    %624 = vmatprep.subr.mxu0 0.0
    %625 = vmatpush1.msra.mxu0 0.0
    %626 = vmatprep.subr.mxu0 0.0
    %627 = vmatpush1.msra.mxu0 0.0
    %628 = vmatprep.subr.mxu0 0.0
    %629 = vmatpush1.msra.mxu0 0.0
    %630 = vmatprep.subr.mxu0 0.0
    %631 = vmatpush1.msra.mxu0 0.0
    %632 = vmatprep.subr.mxu0 0.0
    %633 = vmatpush1.msra.mxu0 0.0
    %634 = vmatprep.subr.mxu0 0.0
    %635 = vmatpush1.msra.mxu0 0.0
    %636 = vmatprep.subr.mxu0 0.0
    %637 = vmatpush1.msra.mxu0 0.0
    %638 = vmatprep.subr.mxu0 0.0
    %639 = vmatpush1.msra.mxu0 0.0
    %640 = vmatprep.subr.mxu0 0.0
    %641 = vmatpush1.msra.mxu0 0.0
    %642 = vmatprep.subr.mxu0 0.0
    %643 = vmatpush1.msra.mxu0 0.0
    %644 = vmatprep.subr.mxu0 0.0
    %645 = vmatpush1.msra.mxu0 0.0
    %646 = vmatprep.subr.mxu0 0.0
    %647 = vmatpush1.msra.mxu0 0.0
    %648 = vmatprep.subr.mxu0 0.0
    %649 = vmatpush1.msra.mxu0 0.0
    %650 = vmatprep.subr.mxu0 0.0
    %651 = vmatpush1.msra.mxu0 0.0
    %652 = vmatprep.subr.mxu0 0.0
    %653 = vmatpush1.msra.mxu0 0.0
    %654 = vmatprep.subr.mxu0 0.0
    %655 = vmatpush1.msra.mxu0 0.0
    %656 = vmatprep.subr.mxu0 0.0
    %657 = vmatpush1.msra.mxu0 0.0
    %658 = vmatprep.subr.mxu0 0.0
    %659 = vmatpush1.msra.mxu0 0.0
    %660 = vmatprep.subr.mxu0 0.0
    %661 = vmatpush1.msra.mxu0 0.0
    %662 = vmatprep.subr.mxu0 0.0
    %663 = vmatpush1.msra.mxu0 0.0
    %664 = vmatprep.subr.mxu0 0.0
    %665 = vmatpush1.msra.mxu0 0.0
    %666 = vmatprep.mubr.f32.mxu0 0.0
    %667 = vmatmul.mubr.f32.gmra.mrb[0].mxu0 %v600
    %v668 = vpop.f32.mrb[0].mxu0
    %v669 = vadd.f32 0.0, %v668
    %v670 = vpop.f32.mrb[0].mxu0
    %671 = vdwg.mxu0
    %vm672 = vcmask 80896
    %673 = vst.msk [vmem:[#allocation2] sm:$0xff] %vm672, %v669
    // Predicated region
    $region34: #{nonlinear_mixture_res_forward.1} parent=1 // pred_check
      _
    $region35: #{nonlinear_mixture_res_forward.1} parent=1 // pred_check_branch
      %675 = sbr.rel (0) target = $region37
    $region36: #{nonlinear_mixture_res_forward.1} parent=1 // pred_region
      %s677 = ssub.s32 128, 128
      %678 = vsyncadd [#allocation3], %s677
      %s680 = sshll.u32 [#allocation2], 4
      %s681 = int_to_ptr.vmem [resolvable:$true] %s680
      %683 = dma.vmem_to_hbm [thread:$0]  %s681, 128, %s8, [#allocation3]
    $region37: #{nonlinear_mixture_res_forward.1} parent=1 // pred_fallthru
      _
    // Predicated region
    $region38: #{nonlinear_mixture_res_forward.1} parent=1 // pred_check
      _
    $region39: #{nonlinear_mixture_res_forward.1} parent=1 // pred_check_branch
      %685 = sbr.rel (0) target = $region41
    $region40: #{nonlinear_mixture_res_forward.1} parent=1 // pred_region
      _
    $region41: #{nonlinear_mixture_res_forward.1} parent=1 // pred_fallthru
      _
    // Predicated region
    $region42: #{nonlinear_mixture_res_forward.1} parent=1 // pred_check
      _
    $region43: #{nonlinear_mixture_res_forward.1} parent=1 // pred_check_branch
      %687 = sbr.rel (0) target = $region45
    $region44: #{nonlinear_mixture_res_forward.1} parent=1 // pred_region
      %s689 = ssub.s32 16, 16
      %690 = vsyncadd [#allocation5], %s689
      %s692 = sshll.u32 [#allocation4], 4
      %s693 = int_to_ptr.vmem [resolvable:$true] %s692
      %695 = dma.vmem_to_hbm [thread:$0]  %s693, 16, %s10, [#allocation5]
    $region45: #{nonlinear_mixture_res_forward.1} parent=1 // pred_fallthru
      _
    // Predicated region
    $region46: #{nonlinear_mixture_res_forward.1} parent=1 // pred_check
      _
    $region47: #{nonlinear_mixture_res_forward.1} parent=1 // pred_check_branch
      %697 = sbr.rel (0) target = $region49
    $region48: #{nonlinear_mixture_res_forward.1} parent=1 // pred_region
      %s699 = ssub.s32 16, 16
      %700 = vsyncadd [#allocation5], %s699
      %s702 = sshll.u32 [#allocation6], 4
      %s703 = int_to_ptr.vmem [resolvable:$true] %s702
      %705 = dma.vmem_to_hbm [thread:$0]  %s703, 16, %s11, [#allocation5]
    $region49: #{nonlinear_mixture_res_forward.1} parent=1 // pred_fallthru
      _
    // Predicated region
    $region50: #{nonlinear_mixture_res_forward.1} parent=1 // pred_check
      _
    $region51: #{nonlinear_mixture_res_forward.1} parent=1 // pred_check_branch
      %707 = sbr.rel (0) target = $region53
    $region52: #{nonlinear_mixture_res_forward.1} parent=1 // pred_region
      %708 = dma.done [#allocation3], 128
    $region53: #{nonlinear_mixture_res_forward.1} parent=1 // pred_fallthru
      _
    // Predicated region
    $region54: #{nonlinear_mixture_res_forward.1} parent=1 // pred_check
      _
    $region55: #{nonlinear_mixture_res_forward.1} parent=1 // pred_check_branch
      %710 = sbr.rel (0) target = $region57
    $region56: #{nonlinear_mixture_res_forward.1} parent=1 // pred_region
      _
    $region57: #{nonlinear_mixture_res_forward.1} parent=1 // pred_fallthru
      _
    // Predicated region
    $region58: #{nonlinear_mixture_res_forward.1} parent=1 // pred_check
      _
    $region59: #{nonlinear_mixture_res_forward.1} parent=1 // pred_check_branch
      %712 = sbr.rel (0) target = $region61
    $region60: #{nonlinear_mixture_res_forward.1} parent=1 // pred_region
      %713 = dma.done [#allocation5], 16
    $region61: #{nonlinear_mixture_res_forward.1} parent=1 // pred_fallthru
      _
    // Predicated region
    $region62: #{nonlinear_mixture_res_forward.1} parent=1 // pred_check
      _
    $region63: #{nonlinear_mixture_res_forward.1} parent=1 // pred_check_branch
      %715 = sbr.rel (0) target = $region65
    $region64: #{nonlinear_mixture_res_forward.1} parent=1 // pred_region
      %716 = dma.done [#allocation5], 16
    $region65: #{nonlinear_mixture_res_forward.1} parent=1 // pred_fallthru
      _
    %717 = vsyncpa [#allocation3], 1
    %718 = vsyncpa [#allocation5], 1

</llo_original>
